<compile_context>
chip_gen: v7x
topology: tpu7x:2x2x1
jax: 0.10.0
libtpu: 0.0.40
codegen_flags: <defaults>
</compile_context>

<pallas_src>
import jax
import jax.numpy as jnp
from jax import lax
from jax.experimental import pallas as pl
from jax.experimental.pallas import tpu as pltpu


def _round_up(x, m):
    return ((x + m - 1) // m) * m


def _largest_divisor_leq(n, target):
    best = 1
    for d in range(1, n + 1):
        if n % d == 0 and d <= target:
            best = d
    return best


def lstm_last_h_kernel(gx_ref, whh_ref, h_out_ref, h_sc, c_sc):
    """One grid step: advance the LSTM recurrence by T_TILE timesteps.

    gx_ref : (T_TILE, B_TILE, 4H) f32  -- precomputed x@W_ih^T + b_ih + b_hh
    whh_ref: (H, 4H)              bf16 -- W_hh^T, gate-segment layout [i|f|g|o]
    h_out  : (B_TILE, H)          f32  -- last hidden state for this batch block
    h_sc/c_sc: (B_TILE, H)        f32  -- VMEM scratch, carries state across grid
    """
    t = pl.program_id(1)
    nt = pl.num_programs(1)
    t_tile = gx_ref.shape[0]
    H = h_sc.shape[1]

    @pl.when(t == 0)
    def _():
        h_sc[...] = jnp.zeros_like(h_sc)
        c_sc[...] = jnp.zeros_like(c_sc)

    def step(i, carry):
        h, c = carry
        # Recurrent matmul: bf16 operands, f32 accumulate on the MXU.
        # TODO(synk): keep W_hh stationary across timesteps via
        # pltpu.matmul_push_rhs / matmul_acc_lhs / matmul_pop instead of
        # re-pushing the RHS each step.
        gates = gx_ref[i] + jnp.dot(
            h.astype(jnp.bfloat16), whh_ref[...],
            preferred_element_type=jnp.float32)
        # Gate math kept in f32 (v5e has no bf16 VPU/EUP path).
        i_g = jax.nn.sigmoid(gates[:, 0 * H:1 * H])
        f_g = jax.nn.sigmoid(gates[:, 1 * H:2 * H])
        g_g = jnp.tanh(gates[:, 2 * H:3 * H])
        o_g = jax.nn.sigmoid(gates[:, 3 * H:4 * H])
        c_new = f_g * c + i_g * g_g
        h_new = o_g * jnp.tanh(c_new)
        return (h_new, c_new)

    h, c = lax.fori_loop(0, t_tile, step, (h_sc[...], c_sc[...]),
                         unroll=min(t_tile, 8))
    h_sc[...] = h
    c_sc[...] = c

    @pl.when(t == nt - 1)
    def _():
        h_out_ref[...] = h.astype(h_out_ref.dtype)


@jax.jit
def code_encoder_forward(tokens, emb_table, w_ih, w_hh, b_ih, b_hh):
    """Equivalent of CodeEncoder.forward: embed -> LSTM -> h.squeeze(0)."""
    B, T = tokens.shape
    E = emb_table.shape[1]
    H = w_hh.shape[1]
    Bp = _round_up(B, 8)      # f32 sublane quantum

    # --- glue (fused in this jit): time-major embedding gather + hoisted
    # input projection, emitted directly in the kernel's (T, Bp, 4H) layout.
    tok_tm = jnp.pad(tokens.T, ((0, 0), (0, Bp - B)))         # (T, Bp)
    x = jnp.take(emb_table, tok_tm, axis=0)                    # (T, Bp, E)
    bias = b_ih + b_hh                                          # (4H,)
    gx = (x.reshape(T * Bp, E) @ w_ih.T + bias)                 # tall MXU matmul
    gx = gx.reshape(T, Bp, 4 * H).astype(jnp.float32)

    # Recurrent weight, bf16 operands for the in-kernel matmul.
    whh = w_hh.T.astype(jnp.bfloat16)                           # (H, 4H)

    # --- tiling ---
    t_tile = _largest_divisor_leq(T, 32)          # amortize per-step overhead
    nt = T // t_tile
    nb = 2 if Bp % 16 == 0 else 1                 # v7x: batch across both TCs
    b_tile = Bp // nb

    # Explicit VMEM budget (double-buffered gx tile + whh + out + scratch).
    vmem_need = (2 * (t_tile * b_tile * 4 * H * 4)
                 + 2 * (H * 4 * H * 2)
                 + 2 * (b_tile * H * 4)
                 + 2 * (b_tile * H * 4))
    vmem_limit = int(min(max(2 * vmem_need + (1 << 20), 16 << 20), 64 << 20))

    h_pad = pl.pallas_call(
        lstm_last_h_kernel,
        out_shape=jax.ShapeDtypeStruct((Bp, H), jnp.float32),
        grid_spec=pltpu.PrefetchScalarGridSpec(
            num_scalar_prefetch=0,
            grid=(nb, nt),
            in_specs=[
                pl.BlockSpec((t_tile, b_tile, 4 * H), lambda b, t: (t, b, 0)),
                pl.BlockSpec((H, 4 * H), lambda b, t: (0, 0)),
            ],
            out_specs=pl.BlockSpec((b_tile, H), lambda b, t: (b, 0)),
            scratch_shapes=[
                pltpu.VMEM((b_tile, H), jnp.float32),   # h carry
                pltpu.VMEM((b_tile, H), jnp.float32),   # c carry
            ],
        ),
        compiler_params=pltpu.CompilerParams(
            dimension_semantics=("parallel", "arbitrary"),
            vmem_limit_bytes=vmem_limit,
        ),
    )(gx, whh)

    return h_pad[:B, :H]


def code_encoder_reference(tokens, emb_table, w_ih, w_hh, b_ih, b_hh):
    """Pure-JAX reference (lax.scan) mirroring torch.nn.LSTM semantics."""
    x = jnp.take(emb_table, tokens, axis=0)                    # (B, T, E)
    B = tokens.shape[0]
    H = w_hh.shape[1]

    def step(carry, x_t):
        h, c = carry
        gates = x_t @ w_ih.T + h @ w_hh.T + b_ih + b_hh
        i_g, f_g, g_g, o_g = jnp.split(gates, 4, axis=-1)
        i_g = jax.nn.sigmoid(i_g)
        f_g = jax.nn.sigmoid(f_g)
        g_g = jnp.tanh(g_g)
        o_g = jax.nn.sigmoid(o_g)
        c_new = f_g * c + i_g * g_g
        h_new = o_g * jnp.tanh(c_new)
        return (h_new, c_new), None

    h0 = jnp.zeros((B, H), jnp.float32)
    c0 = jnp.zeros((B, H), jnp.float32)
    (h_last, _), _ = lax.scan(step, (h0, c0), jnp.transpose(x, (1, 0, 2)))
    return h_last


if __name__ == "__main__":
    # Small shapes consistent with the module defaults.
    VOCAB, EMBED_DIM, HIDDEN = 50, 64, 64
    B, T = 2, 8

    key = jax.random.PRNGKey(0)
    k_emb, k_wih, k_whh, k_bih, k_bhh, k_tok = jax.random.split(key, 6)

    scale = 1.0 / jnp.sqrt(HIDDEN)
    emb_table = 0.1 * jax.random.normal(k_emb, (VOCAB, EMBED_DIM), jnp.float32)
    emb_table = emb_table.at[0].set(0.0)  # padding_idx = 0
    w_ih = jax.random.uniform(k_wih, (4 * HIDDEN, EMBED_DIM), jnp.float32,
                              -scale, scale)
    w_hh = jax.random.uniform(k_whh, (4 * HIDDEN, HIDDEN), jnp.float32,
                              -scale, scale)
    b_ih = jax.random.uniform(k_bih, (4 * HIDDEN,), jnp.float32, -scale, scale)
    b_hh = jax.random.uniform(k_bhh, (4 * HIDDEN,), jnp.float32, -scale, scale)

    tokens = jax.random.randint(k_tok, (B, T), 0, VOCAB, jnp.int32)

    h_pallas = code_encoder_forward(tokens, emb_table, w_ih, w_hh, b_ih, b_hh)
    h_pallas = jax.block_until_ready(h_pallas)

    h_ref = code_encoder_reference(tokens, emb_table, w_ih, w_hh, b_ih, b_hh)
    assert h_pallas.shape == (B, HIDDEN)
    # bf16 recurrent-matmul operands -> tolerance loosened vs. the f32 reference.
    assert jnp.allclose(h_pallas, h_ref, atol=2e-2, rtol=2e-2), (
        "Pallas LSTM output mismatch vs reference"
    )
    # TODO(synk): like torch.nn.LSTM without pack_padded_sequence, padding
    # tokens after the true sequence end still pass through the recurrence.
    print("KERNEL_OK")
</pallas_src>

<mosaic_0001>
module attributes {stable_mosaic.version = 11 : i64} {
  func.func @lstm_last_h_kernel(%arg0: i32, %arg1: i32, %arg2: memref<8x8x256xf32, #tpu.memory_space<vmem>>, %arg3: memref<64x256xbf16, #tpu.memory_space<vmem>>, %arg4: memref<8x64xf32, #tpu.memory_space<vmem>>, %arg5: memref<8x64xf32, #tpu.memory_space<vmem>>, %arg6: memref<8x64xf32, #tpu.memory_space<vmem>>) attributes {dimension_semantics = [#tpu.dimension_semantics<parallel>, #tpu.dimension_semantics<arbitrary>], iteration_bounds = array<i64: 1, 1>, scalar_prefetch = 0 : i64, scratch_operands = 2 : i64, tpu.core_type = #tpu.core_type<tc>, window_params = [{transform_indices = @transform_0, window_bounds = array<i64: 8, 8, 256>}, {pipeline_mode = #tpu.pipeline_mode<synchronous>, transform_indices = @transform_1, window_bounds = array<i64: 64, 256>}, {transform_indices = @transform_2, window_bounds = array<i64: 8, 64>}]} {
    %c0_i32 = arith.constant 0 : i32
    %0 = arith.cmpi eq, %arg1, %c0_i32 : i32
    %1 = arith.extui %0 : i1 to i32
    %c0_i32_0 = arith.constant 0 : i32
    %2 = arith.cmpi ne, %1, %c0_i32_0 : i32
    scf.if %2 {
      %cst_74 = arith.constant 0.000000e+00 : f32
      %266 = vector.broadcast %cst_74 : f32 to vector<8x64xf32>
      %c0_75 = arith.constant 0 : index
      %c0_76 = arith.constant 0 : index
      %267 = vector.load %arg5[%c0_75, %c0_76] : memref<8x64xf32, #tpu.memory_space<vmem>>, vector<8x64xf32>
      tpu.vector_store %arg5[%c0_75, %c0_76], %266 {strides = array<i32>} : memref<8x64xf32, #tpu.memory_space<vmem>>, vector<8x64xf32>,
      %cst_77 = arith.constant 0.000000e+00 : f32
      %268 = vector.broadcast %cst_77 : f32 to vector<8x64xf32>
      %c0_78 = arith.constant 0 : index
      %c0_79 = arith.constant 0 : index
      %269 = vector.load %arg6[%c0_78, %c0_79] : memref<8x64xf32, #tpu.memory_space<vmem>>, vector<8x64xf32>
      tpu.vector_store %arg6[%c0_78, %c0_79], %268 {strides = array<i32>} : memref<8x64xf32, #tpu.memory_space<vmem>>, vector<8x64xf32>,
    } else {
    }
    %c0 = arith.constant 0 : index
    %c0_1 = arith.constant 0 : index
    %3 = vector.load %arg5[%c0, %c0_1] : memref<8x64xf32, #tpu.memory_space<vmem>>, vector<8x64xf32>
    %c0_2 = arith.constant 0 : index
    %c0_3 = arith.constant 0 : index
    %4 = vector.load %arg6[%c0_2, %c0_3] : memref<8x64xf32, #tpu.memory_space<vmem>>, vector<8x64xf32>
    %c0_i32_4 = arith.constant 0 : i32
    %5 = arith.index_cast %c0_i32_4 : i32 to index
    %c0_5 = arith.constant 0 : index
    %c0_6 = arith.constant 0 : index
    %6 = vector.load %arg2[%5, %c0_5, %c0_6] : memref<8x8x256xf32, #tpu.memory_space<vmem>>, vector<1x8x256xf32>
    %7 = vector.shape_cast %6 : vector<1x8x256xf32> to vector<8x256xf32>
    %8 = arith.truncf %3 : vector<8x64xf32> to vector<8x64xbf16>
    %c0_7 = arith.constant 0 : index
    %c0_8 = arith.constant 0 : index
    %9 = vector.load %arg3[%c0_7, %c0_8] : memref<64x256xbf16, #tpu.memory_space<vmem>>, vector<64x256xbf16>
    %cst = arith.constant dense<0.000000e+00> : vector<8x256xf32>
    %10 = tpu.matmul %8, %9, %cst {dimension_numbers = #tpu.dot_dimension_numbers<[1], [0], [0], [1], [0, 0, 1, 1], [], []>} : vector<8x64xbf16>, vector<64x256xbf16>, vector<8x256xf32> -> vector<8x256xf32>
    %11 = arith.addf %7, %10 : vector<8x256xf32>
    %12 = vector.extract_strided_slice %11 {offsets = [0, 0], sizes = [8, 64], strides = [1, 1]} : vector<8x256xf32> to vector<8x64xf32>
    %13 = arith.negf %12 : vector<8x64xf32>
    %14 = math.exp %13 : vector<8x64xf32>
    %cst_9 = arith.constant 1.000000e+00 : f32
    %15 = vector.broadcast %cst_9 : f32 to vector<8x64xf32>
    %16 = arith.addf %15, %14 : vector<8x64xf32>
    %17 = arith.divf %15, %16 : vector<8x64xf32>
    %18 = vector.extract_strided_slice %11 {offsets = [0, 64], sizes = [8, 64], strides = [1, 1]} : vector<8x256xf32> to vector<8x64xf32>
    %19 = arith.negf %18 : vector<8x64xf32>
    %20 = math.exp %19 : vector<8x64xf32>
    %cst_10 = arith.constant 1.000000e+00 : f32
    %21 = vector.broadcast %cst_10 : f32 to vector<8x64xf32>
    %22 = arith.addf %21, %20 : vector<8x64xf32>
    %23 = arith.divf %21, %22 : vector<8x64xf32>
    %24 = vector.extract_strided_slice %11 {offsets = [0, 128], sizes = [8, 64], strides = [1, 1]} : vector<8x256xf32> to vector<8x64xf32>
    %25 = math.tanh %24 : vector<8x64xf32>
    %26 = vector.extract_strided_slice %11 {offsets = [0, 192], sizes = [8, 64], strides = [1, 1]} : vector<8x256xf32> to vector<8x64xf32>
    %27 = arith.negf %26 : vector<8x64xf32>
    %28 = math.exp %27 : vector<8x64xf32>
    %cst_11 = arith.constant 1.000000e+00 : f32
    %29 = vector.broadcast %cst_11 : f32 to vector<8x64xf32>
    %30 = arith.addf %29, %28 : vector<8x64xf32>
    %31 = arith.divf %29, %30 : vector<8x64xf32>
    %32 = arith.mulf %23, %4 : vector<8x64xf32>
    %33 = arith.mulf %17, %25 : vector<8x64xf32>
    %34 = arith.addf %32, %33 : vector<8x64xf32>
    %35 = math.tanh %34 : vector<8x64xf32>
    %36 = arith.mulf %31, %35 : vector<8x64xf32>
    %c1_i32 = arith.constant 1 : i32
    %37 = arith.index_cast %c1_i32 : i32 to index
    %c0_12 = arith.constant 0 : index
    %c0_13 = arith.constant 0 : index
    %38 = vector.load %arg2[%37, %c0_12, %c0_13] : memref<8x8x256xf32, #tpu.memory_space<vmem>>, vector<1x8x256xf32>
    %39 = vector.shape_cast %38 : vector<1x8x256xf32> to vector<8x256xf32>
    %40 = arith.truncf %36 : vector<8x64xf32> to vector<8x64xbf16>
    %c0_14 = arith.constant 0 : index
    %c0_15 = arith.constant 0 : index
    %41 = vector.load %arg3[%c0_14, %c0_15] : memref<64x256xbf16, #tpu.memory_space<vmem>>, vector<64x256xbf16>
    %cst_16 = arith.constant dense<0.000000e+00> : vector<8x256xf32>
    %42 = tpu.matmul %40, %41, %cst_16 {dimension_numbers = #tpu.dot_dimension_numbers<[1], [0], [0], [1], [0, 0, 1, 1], [], []>} : vector<8x64xbf16>, vector<64x256xbf16>, vector<8x256xf32> -> vector<8x256xf32>
    %43 = arith.addf %39, %42 : vector<8x256xf32>
    %44 = vector.extract_strided_slice %43 {offsets = [0, 0], sizes = [8, 64], strides = [1, 1]} : vector<8x256xf32> to vector<8x64xf32>
    %45 = arith.negf %44 : vector<8x64xf32>
    %46 = math.exp %45 : vector<8x64xf32>
    %cst_17 = arith.constant 1.000000e+00 : f32
    %47 = vector.broadcast %cst_17 : f32 to vector<8x64xf32>
    %48 = arith.addf %47, %46 : vector<8x64xf32>
    %49 = arith.divf %47, %48 : vector<8x64xf32>
    %50 = vector.extract_strided_slice %43 {offsets = [0, 64], sizes = [8, 64], strides = [1, 1]} : vector<8x256xf32> to vector<8x64xf32>
    %51 = arith.negf %50 : vector<8x64xf32>
    %52 = math.exp %51 : vector<8x64xf32>
    %cst_18 = arith.constant 1.000000e+00 : f32
    %53 = vector.broadcast %cst_18 : f32 to vector<8x64xf32>
    %54 = arith.addf %53, %52 : vector<8x64xf32>
    %55 = arith.divf %53, %54 : vector<8x64xf32>
    %56 = vector.extract_strided_slice %43 {offsets = [0, 128], sizes = [8, 64], strides = [1, 1]} : vector<8x256xf32> to vector<8x64xf32>
    %57 = math.tanh %56 : vector<8x64xf32>
    %58 = vector.extract_strided_slice %43 {offsets = [0, 192], sizes = [8, 64], strides = [1, 1]} : vector<8x256xf32> to vector<8x64xf32>
    %59 = arith.negf %58 : vector<8x64xf32>
    %60 = math.exp %59 : vector<8x64xf32>
    %cst_19 = arith.constant 1.000000e+00 : f32
    %61 = vector.broadcast %cst_19 : f32 to vector<8x64xf32>
    %62 = arith.addf %61, %60 : vector<8x64xf32>
    %63 = arith.divf %61, %62 : vector<8x64xf32>
    %64 = arith.mulf %55, %34 : vector<8x64xf32>
    %65 = arith.mulf %49, %57 : vector<8x64xf32>
    %66 = arith.addf %64, %65 : vector<8x64xf32>
    %67 = math.tanh %66 : vector<8x64xf32>
    %68 = arith.mulf %63, %67 : vector<8x64xf32>
    %c2_i32 = arith.constant 2 : i32
    %69 = arith.index_cast %c2_i32 : i32 to index
    %c0_20 = arith.constant 0 : index
    %c0_21 = arith.constant 0 : index
    %70 = vector.load %arg2[%69, %c0_20, %c0_21] : memref<8x8x256xf32, #tpu.memory_space<vmem>>, vector<1x8x256xf32>
    %71 = vector.shape_cast %70 : vector<1x8x256xf32> to vector<8x256xf32>
    %72 = arith.truncf %68 : vector<8x64xf32> to vector<8x64xbf16>
    %c0_22 = arith.constant 0 : index
    %c0_23 = arith.constant 0 : index
    %73 = vector.load %arg3[%c0_22, %c0_23] : memref<64x256xbf16, #tpu.memory_space<vmem>>, vector<64x256xbf16>
    %cst_24 = arith.constant dense<0.000000e+00> : vector<8x256xf32>
    %74 = tpu.matmul %72, %73, %cst_24 {dimension_numbers = #tpu.dot_dimension_numbers<[1], [0], [0], [1], [0, 0, 1, 1], [], []>} : vector<8x64xbf16>, vector<64x256xbf16>, vector<8x256xf32> -> vector<8x256xf32>
    %75 = arith.addf %71, %74 : vector<8x256xf32>
    %76 = vector.extract_strided_slice %75 {offsets = [0, 0], sizes = [8, 64], strides = [1, 1]} : vector<8x256xf32> to vector<8x64xf32>
    %77 = arith.negf %76 : vector<8x64xf32>
    %78 = math.exp %77 : vector<8x64xf32>
    %cst_25 = arith.constant 1.000000e+00 : f32
    %79 = vector.broadcast %cst_25 : f32 to vector<8x64xf32>
    %80 = arith.addf %79, %78 : vector<8x64xf32>
    %81 = arith.divf %79, %80 : vector<8x64xf32>
    %82 = vector.extract_strided_slice %75 {offsets = [0, 64], sizes = [8, 64], strides = [1, 1]} : vector<8x256xf32> to vector<8x64xf32>
    %83 = arith.negf %82 : vector<8x64xf32>
    %84 = math.exp %83 : vector<8x64xf32>
    %cst_26 = arith.constant 1.000000e+00 : f32
    %85 = vector.broadcast %cst_26 : f32 to vector<8x64xf32>
    %86 = arith.addf %85, %84 : vector<8x64xf32>
    %87 = arith.divf %85, %86 : vector<8x64xf32>
    %88 = vector.extract_strided_slice %75 {offsets = [0, 128], sizes = [8, 64], strides = [1, 1]} : vector<8x256xf32> to vector<8x64xf32>
    %89 = math.tanh %88 : vector<8x64xf32>
    %90 = vector.extract_strided_slice %75 {offsets = [0, 192], sizes = [8, 64], strides = [1, 1]} : vector<8x256xf32> to vector<8x64xf32>
    %91 = arith.negf %90 : vector<8x64xf32>
    %92 = math.exp %91 : vector<8x64xf32>
    %cst_27 = arith.constant 1.000000e+00 : f32
    %93 = vector.broadcast %cst_27 : f32 to vector<8x64xf32>
    %94 = arith.addf %93, %92 : vector<8x64xf32>
    %95 = arith.divf %93, %94 : vector<8x64xf32>
    %96 = arith.mulf %87, %66 : vector<8x64xf32>
    %97 = arith.mulf %81, %89 : vector<8x64xf32>
    %98 = arith.addf %96, %97 : vector<8x64xf32>
    %99 = math.tanh %98 : vector<8x64xf32>
    %100 = arith.mulf %95, %99 : vector<8x64xf32>
    %c3_i32 = arith.constant 3 : i32
    %101 = arith.index_cast %c3_i32 : i32 to index
    %c0_28 = arith.constant 0 : index
    %c0_29 = arith.constant 0 : index
    %102 = vector.load %arg2[%101, %c0_28, %c0_29] : memref<8x8x256xf32, #tpu.memory_space<vmem>>, vector<1x8x256xf32>
    %103 = vector.shape_cast %102 : vector<1x8x256xf32> to vector<8x256xf32>
    %104 = arith.truncf %100 : vector<8x64xf32> to vector<8x64xbf16>
    %c0_30 = arith.constant 0 : index
    %c0_31 = arith.constant 0 : index
    %105 = vector.load %arg3[%c0_30, %c0_31] : memref<64x256xbf16, #tpu.memory_space<vmem>>, vector<64x256xbf16>
    %cst_32 = arith.constant dense<0.000000e+00> : vector<8x256xf32>
    %106 = tpu.matmul %104, %105, %cst_32 {dimension_numbers = #tpu.dot_dimension_numbers<[1], [0], [0], [1], [0, 0, 1, 1], [], []>} : vector<8x64xbf16>, vector<64x256xbf16>, vector<8x256xf32> -> vector<8x256xf32>
    %107 = arith.addf %103, %106 : vector<8x256xf32>
    %108 = vector.extract_strided_slice %107 {offsets = [0, 0], sizes = [8, 64], strides = [1, 1]} : vector<8x256xf32> to vector<8x64xf32>
    %109 = arith.negf %108 : vector<8x64xf32>
    %110 = math.exp %109 : vector<8x64xf32>
    %cst_33 = arith.constant 1.000000e+00 : f32
    %111 = vector.broadcast %cst_33 : f32 to vector<8x64xf32>
    %112 = arith.addf %111, %110 : vector<8x64xf32>
    %113 = arith.divf %111, %112 : vector<8x64xf32>
    %114 = vector.extract_strided_slice %107 {offsets = [0, 64], sizes = [8, 64], strides = [1, 1]} : vector<8x256xf32> to vector<8x64xf32>
    %115 = arith.negf %114 : vector<8x64xf32>
    %116 = math.exp %115 : vector<8x64xf32>
    %cst_34 = arith.constant 1.000000e+00 : f32
    %117 = vector.broadcast %cst_34 : f32 to vector<8x64xf32>
    %118 = arith.addf %117, %116 : vector<8x64xf32>
    %119 = arith.divf %117, %118 : vector<8x64xf32>
    %120 = vector.extract_strided_slice %107 {offsets = [0, 128], sizes = [8, 64], strides = [1, 1]} : vector<8x256xf32> to vector<8x64xf32>
    %121 = math.tanh %120 : vector<8x64xf32>
    %122 = vector.extract_strided_slice %107 {offsets = [0, 192], sizes = [8, 64], strides = [1, 1]} : vector<8x256xf32> to vector<8x64xf32>
    %123 = arith.negf %122 : vector<8x64xf32>
    %124 = math.exp %123 : vector<8x64xf32>
    %cst_35 = arith.constant 1.000000e+00 : f32
    %125 = vector.broadcast %cst_35 : f32 to vector<8x64xf32>
    %126 = arith.addf %125, %124 : vector<8x64xf32>
    %127 = arith.divf %125, %126 : vector<8x64xf32>
    %128 = arith.mulf %119, %98 : vector<8x64xf32>
    %129 = arith.mulf %113, %121 : vector<8x64xf32>
    %130 = arith.addf %128, %129 : vector<8x64xf32>
    %131 = math.tanh %130 : vector<8x64xf32>
    %132 = arith.mulf %127, %131 : vector<8x64xf32>
    %c4_i32 = arith.constant 4 : i32
    %133 = arith.index_cast %c4_i32 : i32 to index
    %c0_36 = arith.constant 0 : index
    %c0_37 = arith.constant 0 : index
    %134 = vector.load %arg2[%133, %c0_36, %c0_37] : memref<8x8x256xf32, #tpu.memory_space<vmem>>, vector<1x8x256xf32>
    %135 = vector.shape_cast %134 : vector<1x8x256xf32> to vector<8x256xf32>
    %136 = arith.truncf %132 : vector<8x64xf32> to vector<8x64xbf16>
    %c0_38 = arith.constant 0 : index
    %c0_39 = arith.constant 0 : index
    %137 = vector.load %arg3[%c0_38, %c0_39] : memref<64x256xbf16, #tpu.memory_space<vmem>>, vector<64x256xbf16>
    %cst_40 = arith.constant dense<0.000000e+00> : vector<8x256xf32>
    %138 = tpu.matmul %136, %137, %cst_40 {dimension_numbers = #tpu.dot_dimension_numbers<[1], [0], [0], [1], [0, 0, 1, 1], [], []>} : vector<8x64xbf16>, vector<64x256xbf16>, vector<8x256xf32> -> vector<8x256xf32>
    %139 = arith.addf %135, %138 : vector<8x256xf32>
    %140 = vector.extract_strided_slice %139 {offsets = [0, 0], sizes = [8, 64], strides = [1, 1]} : vector<8x256xf32> to vector<8x64xf32>
    %141 = arith.negf %140 : vector<8x64xf32>
    %142 = math.exp %141 : vector<8x64xf32>
    %cst_41 = arith.constant 1.000000e+00 : f32
    %143 = vector.broadcast %cst_41 : f32 to vector<8x64xf32>
    %144 = arith.addf %143, %142 : vector<8x64xf32>
    %145 = arith.divf %143, %144 : vector<8x64xf32>
    %146 = vector.extract_strided_slice %139 {offsets = [0, 64], sizes = [8, 64], strides = [1, 1]} : vector<8x256xf32> to vector<8x64xf32>
    %147 = arith.negf %146 : vector<8x64xf32>
    %148 = math.exp %147 : vector<8x64xf32>
    %cst_42 = arith.constant 1.000000e+00 : f32
    %149 = vector.broadcast %cst_42 : f32 to vector<8x64xf32>
    %150 = arith.addf %149, %148 : vector<8x64xf32>
    %151 = arith.divf %149, %150 : vector<8x64xf32>
    %152 = vector.extract_strided_slice %139 {offsets = [0, 128], sizes = [8, 64], strides = [1, 1]} : vector<8x256xf32> to vector<8x64xf32>
    %153 = math.tanh %152 : vector<8x64xf32>
    %154 = vector.extract_strided_slice %139 {offsets = [0, 192], sizes = [8, 64], strides = [1, 1]} : vector<8x256xf32> to vector<8x64xf32>
    %155 = arith.negf %154 : vector<8x64xf32>
    %156 = math.exp %155 : vector<8x64xf32>
    %cst_43 = arith.constant 1.000000e+00 : f32
    %157 = vector.broadcast %cst_43 : f32 to vector<8x64xf32>
    %158 = arith.addf %157, %156 : vector<8x64xf32>
    %159 = arith.divf %157, %158 : vector<8x64xf32>
    %160 = arith.mulf %151, %130 : vector<8x64xf32>
    %161 = arith.mulf %145, %153 : vector<8x64xf32>
    %162 = arith.addf %160, %161 : vector<8x64xf32>
    %163 = math.tanh %162 : vector<8x64xf32>
    %164 = arith.mulf %159, %163 : vector<8x64xf32>
    %c5_i32 = arith.constant 5 : i32
    %165 = arith.index_cast %c5_i32 : i32 to index
    %c0_44 = arith.constant 0 : index
    %c0_45 = arith.constant 0 : index
    %166 = vector.load %arg2[%165, %c0_44, %c0_45] : memref<8x8x256xf32, #tpu.memory_space<vmem>>, vector<1x8x256xf32>
    %167 = vector.shape_cast %166 : vector<1x8x256xf32> to vector<8x256xf32>
    %168 = arith.truncf %164 : vector<8x64xf32> to vector<8x64xbf16>
    %c0_46 = arith.constant 0 : index
    %c0_47 = arith.constant 0 : index
    %169 = vector.load %arg3[%c0_46, %c0_47] : memref<64x256xbf16, #tpu.memory_space<vmem>>, vector<64x256xbf16>
    %cst_48 = arith.constant dense<0.000000e+00> : vector<8x256xf32>
    %170 = tpu.matmul %168, %169, %cst_48 {dimension_numbers = #tpu.dot_dimension_numbers<[1], [0], [0], [1], [0, 0, 1, 1], [], []>} : vector<8x64xbf16>, vector<64x256xbf16>, vector<8x256xf32> -> vector<8x256xf32>
    %171 = arith.addf %167, %170 : vector<8x256xf32>
    %172 = vector.extract_strided_slice %171 {offsets = [0, 0], sizes = [8, 64], strides = [1, 1]} : vector<8x256xf32> to vector<8x64xf32>
    %173 = arith.negf %172 : vector<8x64xf32>
    %174 = math.exp %173 : vector<8x64xf32>
    %cst_49 = arith.constant 1.000000e+00 : f32
    %175 = vector.broadcast %cst_49 : f32 to vector<8x64xf32>
    %176 = arith.addf %175, %174 : vector<8x64xf32>
    %177 = arith.divf %175, %176 : vector<8x64xf32>
    %178 = vector.extract_strided_slice %171 {offsets = [0, 64], sizes = [8, 64], strides = [1, 1]} : vector<8x256xf32> to vector<8x64xf32>
    %179 = arith.negf %178 : vector<8x64xf32>
    %180 = math.exp %179 : vector<8x64xf32>
    %cst_50 = arith.constant 1.000000e+00 : f32
    %181 = vector.broadcast %cst_50 : f32 to vector<8x64xf32>
    %182 = arith.addf %181, %180 : vector<8x64xf32>
    %183 = arith.divf %181, %182 : vector<8x64xf32>
    %184 = vector.extract_strided_slice %171 {offsets = [0, 128], sizes = [8, 64], strides = [1, 1]} : vector<8x256xf32> to vector<8x64xf32>
    %185 = math.tanh %184 : vector<8x64xf32>
    %186 = vector.extract_strided_slice %171 {offsets = [0, 192], sizes = [8, 64], strides = [1, 1]} : vector<8x256xf32> to vector<8x64xf32>
    %187 = arith.negf %186 : vector<8x64xf32>
    %188 = math.exp %187 : vector<8x64xf32>
    %cst_51 = arith.constant 1.000000e+00 : f32
    %189 = vector.broadcast %cst_51 : f32 to vector<8x64xf32>
    %190 = arith.addf %189, %188 : vector<8x64xf32>
    %191 = arith.divf %189, %190 : vector<8x64xf32>
    %192 = arith.mulf %183, %162 : vector<8x64xf32>
    %193 = arith.mulf %177, %185 : vector<8x64xf32>
    %194 = arith.addf %192, %193 : vector<8x64xf32>
    %195 = math.tanh %194 : vector<8x64xf32>
    %196 = arith.mulf %191, %195 : vector<8x64xf32>
    %c6_i32 = arith.constant 6 : i32
    %197 = arith.index_cast %c6_i32 : i32 to index
    %c0_52 = arith.constant 0 : index
    %c0_53 = arith.constant 0 : index
    %198 = vector.load %arg2[%197, %c0_52, %c0_53] : memref<8x8x256xf32, #tpu.memory_space<vmem>>, vector<1x8x256xf32>
    %199 = vector.shape_cast %198 : vector<1x8x256xf32> to vector<8x256xf32>
    %200 = arith.truncf %196 : vector<8x64xf32> to vector<8x64xbf16>
    %c0_54 = arith.constant 0 : index
    %c0_55 = arith.constant 0 : index
    %201 = vector.load %arg3[%c0_54, %c0_55] : memref<64x256xbf16, #tpu.memory_space<vmem>>, vector<64x256xbf16>
    %cst_56 = arith.constant dense<0.000000e+00> : vector<8x256xf32>
    %202 = tpu.matmul %200, %201, %cst_56 {dimension_numbers = #tpu.dot_dimension_numbers<[1], [0], [0], [1], [0, 0, 1, 1], [], []>} : vector<8x64xbf16>, vector<64x256xbf16>, vector<8x256xf32> -> vector<8x256xf32>
    %203 = arith.addf %199, %202 : vector<8x256xf32>
    %204 = vector.extract_strided_slice %203 {offsets = [0, 0], sizes = [8, 64], strides = [1, 1]} : vector<8x256xf32> to vector<8x64xf32>
    %205 = arith.negf %204 : vector<8x64xf32>
    %206 = math.exp %205 : vector<8x64xf32>
    %cst_57 = arith.constant 1.000000e+00 : f32
    %207 = vector.broadcast %cst_57 : f32 to vector<8x64xf32>
    %208 = arith.addf %207, %206 : vector<8x64xf32>
    %209 = arith.divf %207, %208 : vector<8x64xf32>
    %210 = vector.extract_strided_slice %203 {offsets = [0, 64], sizes = [8, 64], strides = [1, 1]} : vector<8x256xf32> to vector<8x64xf32>
    %211 = arith.negf %210 : vector<8x64xf32>
    %212 = math.exp %211 : vector<8x64xf32>
    %cst_58 = arith.constant 1.000000e+00 : f32
    %213 = vector.broadcast %cst_58 : f32 to vector<8x64xf32>
    %214 = arith.addf %213, %212 : vector<8x64xf32>
    %215 = arith.divf %213, %214 : vector<8x64xf32>
    %216 = vector.extract_strided_slice %203 {offsets = [0, 128], sizes = [8, 64], strides = [1, 1]} : vector<8x256xf32> to vector<8x64xf32>
    %217 = math.tanh %216 : vector<8x64xf32>
    %218 = vector.extract_strided_slice %203 {offsets = [0, 192], sizes = [8, 64], strides = [1, 1]} : vector<8x256xf32> to vector<8x64xf32>
    %219 = arith.negf %218 : vector<8x64xf32>
    %220 = math.exp %219 : vector<8x64xf32>
    %cst_59 = arith.constant 1.000000e+00 : f32
    %221 = vector.broadcast %cst_59 : f32 to vector<8x64xf32>
    %222 = arith.addf %221, %220 : vector<8x64xf32>
    %223 = arith.divf %221, %222 : vector<8x64xf32>
    %224 = arith.mulf %215, %194 : vector<8x64xf32>
    %225 = arith.mulf %209, %217 : vector<8x64xf32>
    %226 = arith.addf %224, %225 : vector<8x64xf32>
    %227 = math.tanh %226 : vector<8x64xf32>
    %228 = arith.mulf %223, %227 : vector<8x64xf32>
    %c7_i32 = arith.constant 7 : i32
    %229 = arith.index_cast %c7_i32 : i32 to index
    %c0_60 = arith.constant 0 : index
    %c0_61 = arith.constant 0 : index
    %230 = vector.load %arg2[%229, %c0_60, %c0_61] : memref<8x8x256xf32, #tpu.memory_space<vmem>>, vector<1x8x256xf32>
    %231 = vector.shape_cast %230 : vector<1x8x256xf32> to vector<8x256xf32>
    %232 = arith.truncf %228 : vector<8x64xf32> to vector<8x64xbf16>
    %c0_62 = arith.constant 0 : index
    %c0_63 = arith.constant 0 : index
    %233 = vector.load %arg3[%c0_62, %c0_63] : memref<64x256xbf16, #tpu.memory_space<vmem>>, vector<64x256xbf16>
    %cst_64 = arith.constant dense<0.000000e+00> : vector<8x256xf32>
    %234 = tpu.matmul %232, %233, %cst_64 {dimension_numbers = #tpu.dot_dimension_numbers<[1], [0], [0], [1], [0, 0, 1, 1], [], []>} : vector<8x64xbf16>, vector<64x256xbf16>, vector<8x256xf32> -> vector<8x256xf32>
    %235 = arith.addf %231, %234 : vector<8x256xf32>
    %236 = vector.extract_strided_slice %235 {offsets = [0, 0], sizes = [8, 64], strides = [1, 1]} : vector<8x256xf32> to vector<8x64xf32>
    %237 = arith.negf %236 : vector<8x64xf32>
    %238 = math.exp %237 : vector<8x64xf32>
    %cst_65 = arith.constant 1.000000e+00 : f32
    %239 = vector.broadcast %cst_65 : f32 to vector<8x64xf32>
    %240 = arith.addf %239, %238 : vector<8x64xf32>
    %241 = arith.divf %239, %240 : vector<8x64xf32>
    %242 = vector.extract_strided_slice %235 {offsets = [0, 64], sizes = [8, 64], strides = [1, 1]} : vector<8x256xf32> to vector<8x64xf32>
    %243 = arith.negf %242 : vector<8x64xf32>
    %244 = math.exp %243 : vector<8x64xf32>
    %cst_66 = arith.constant 1.000000e+00 : f32
    %245 = vector.broadcast %cst_66 : f32 to vector<8x64xf32>
    %246 = arith.addf %245, %244 : vector<8x64xf32>
    %247 = arith.divf %245, %246 : vector<8x64xf32>
    %248 = vector.extract_strided_slice %235 {offsets = [0, 128], sizes = [8, 64], strides = [1, 1]} : vector<8x256xf32> to vector<8x64xf32>
    %249 = math.tanh %248 : vector<8x64xf32>
    %250 = vector.extract_strided_slice %235 {offsets = [0, 192], sizes = [8, 64], strides = [1, 1]} : vector<8x256xf32> to vector<8x64xf32>
    %251 = arith.negf %250 : vector<8x64xf32>
    %252 = math.exp %251 : vector<8x64xf32>
    %cst_67 = arith.constant 1.000000e+00 : f32
    %253 = vector.broadcast %cst_67 : f32 to vector<8x64xf32>
    %254 = arith.addf %253, %252 : vector<8x64xf32>
    %255 = arith.divf %253, %254 : vector<8x64xf32>
    %256 = arith.mulf %247, %226 : vector<8x64xf32>
    %257 = arith.mulf %241, %249 : vector<8x64xf32>
    %258 = arith.addf %256, %257 : vector<8x64xf32>
    %259 = math.tanh %258 : vector<8x64xf32>
    %260 = arith.mulf %255, %259 : vector<8x64xf32>
    %c8_i32 = arith.constant 8 : i32
    %c0_68 = arith.constant 0 : index
    %c0_69 = arith.constant 0 : index
    %261 = vector.load %arg5[%c0_68, %c0_69] : memref<8x64xf32, #tpu.memory_space<vmem>>, vector<8x64xf32>
    tpu.vector_store %arg5[%c0_68, %c0_69], %260 {strides = array<i32>} : memref<8x64xf32, #tpu.memory_space<vmem>>, vector<8x64xf32>,
    %c0_70 = arith.constant 0 : index
    %c0_71 = arith.constant 0 : index
    %262 = vector.load %arg6[%c0_70, %c0_71] : memref<8x64xf32, #tpu.memory_space<vmem>>, vector<8x64xf32>
    tpu.vector_store %arg6[%c0_70, %c0_71], %258 {strides = array<i32>} : memref<8x64xf32, #tpu.memory_space<vmem>>, vector<8x64xf32>,
    %c0_i32_72 = arith.constant 0 : i32
    %263 = arith.cmpi eq, %arg1, %c0_i32_72 : i32
    %264 = arith.extui %263 : i1 to i32
    %c0_i32_73 = arith.constant 0 : i32
    %265 = arith.cmpi ne, %264, %c0_i32_73 : i32
    scf.if %265 {
      %c0_74 = arith.constant 0 : index
      %c0_75 = arith.constant 0 : index
      %266 = vector.load %arg4[%c0_74, %c0_75] : memref<8x64xf32, #tpu.memory_space<vmem>>, vector<8x64xf32>
      tpu.vector_store %arg4[%c0_74, %c0_75], %260 {strides = array<i32>} : memref<8x64xf32, #tpu.memory_space<vmem>>, vector<8x64xf32>,
    } else {
    }
    return
  }
  func.func @transform_0(%arg0: i32, %arg1: i32) -> (i32, i32, i32) {
    %c0_i32 = arith.constant 0 : i32
    %c0_i32_0 = arith.constant 0 : i32
    return %arg1, %arg0, %c0_i32 : i32, i32, i32
  }
  func.func @transform_1(%arg0: i32, %arg1: i32) -> (i32, i32) {
    %c0_i32 = arith.constant 0 : i32
    %c0_i32_0 = arith.constant 0 : i32
    %c0_i32_1 = arith.constant 0 : i32
    return %c0_i32, %c0_i32_0 : i32, i32
  }
  func.func @transform_2(%arg0: i32, %arg1: i32) -> (i32, i32) {
    %c0_i32 = arith.constant 0 : i32
    %c0_i32_0 = arith.constant 0 : i32
    return %arg0, %c0_i32 : i32, i32
  }
}

</mosaic_0001>

<llo_original>
// kernel: code_encoder_forward.1
$region0: #{code_encoder_forward.1}
  #allocation0 [shape = 'u32[]', space=smem, size = 0x4, offset = 0x4, fixed_abs, tag = 'smem constant byte address 0x4 - core index']
  #allocation1 [shape = 'u32[144,128]{1,0:T(1,128)}', space=vmem, size = 0x12000, scoped, tag = 'internal scratch']
  #allocation2 [shape = 'f32[8,64]{1,0:T(8,128)}', space=vmem, size = 0x1000, scoped, tag = 'scratch operand']
  #allocation3 [shape = 'f32[8,64]{1,0:T(8,128)}', space=vmem, size = 0x1000, scoped, tag = 'scratch operand']
  %s0 = inlined_call_operand.vmem [shape: f32[8,8,256], index: 0, kind: input, shape index: {}]
  %s1 = inlined_call_operand.vmem [shape: bf16[64,256], index: 1, kind: input, shape index: {}]
  %s2 = inlined_call_operand.vmem [shape: f32[8,64], index: 2, kind: output, shape index: {}]
  %s3 = sld [smem:[#allocation0]]
  $region26: #{code_encoder_forward.1} parent=0
    _
  %s5 = ssub.s32 1, %s3
  %s6 = scalar_select 0, %s5, %s3
  // Predicated region
  $region2: #{code_encoder_forward.1} parent=0 // pred_check
    _
  $region3: #{code_encoder_forward.1} parent=0 // pred_check_branch
    %8 = sbr.rel (0) target = $region5
  $region4: #{code_encoder_forward.1} parent=0 // pred_region
    _
  $region5: #{code_encoder_forward.1} parent=0 // pred_fallthru
    _
  // Predicated region
  $region6: #{code_encoder_forward.1} parent=0 // pred_check
    _
  $region7: #{code_encoder_forward.1} parent=0 // pred_check_branch
    %10 = sbr.rel (0) target = $region9
  $region8: #{code_encoder_forward.1} parent=0 // pred_region
    _
  $region9: #{code_encoder_forward.1} parent=0 // pred_fallthru
    _
  %p12 = scmp.eq.s32.totalorder 0, 0
  // Predicated region
  $region10: #{code_encoder_forward.1} parent=0 // pred_check
    %p13 = pneg %p12
  $region11: #{code_encoder_forward.1} parent=0 // pred_check_branch
    %15 = sbr.rel (%p13) target = $region13
  $region12: #{code_encoder_forward.1} parent=0 // pred_region
    %vm16 = vcmask 523264
    %17 = vst.msk [vmem:[#allocation2] sm:$0xff] %vm16, 0.0
    %18 = vst.msk [vmem:[#allocation3] sm:$0xff] %vm16, 0.0
  $region13: #{code_encoder_forward.1} parent=0 // pred_fallthru
    _
  %v19 = vld [vmem:[#allocation2] sm:$0xff]
  %v20 = vld [vmem:[#allocation3] sm:$0xff]
  %v21 = vld [vmem:[%s0] sm:$0xff]
  %v22 = vld [vmem:[%s0 + $0x8] sm:$0xff]
  %v23 = vpack.c.bf16 %v19, %v19
  %v24 = vld [vmem:[%s1] sm:$0xff]
  %v25 = vld [vmem:[%s1 + $0x8] sm:$0xff]
  %v26 = vld [vmem:[%s1 + $0x10] sm:$0xff]
  %v27 = vld [vmem:[%s1 + $0x18] sm:$0xff]
  %v28 = vld [vmem:[%s1 + $0x20] sm:$0xff]
  %v29 = vld [vmem:[%s1 + $0x28] sm:$0xff]
  %v30 = vld [vmem:[%s1 + $0x30] sm:$0xff]
  %v31 = vld [vmem:[%s1 + $0x38] sm:$0xff]
  %v40 = vunpack.c.l.b16 %v24
  %v41 = vunpack.c.h.b16 %v24
  %v42 = vunpack.c.l.b16 %v25
  %v43 = vunpack.c.h.b16 %v25
  %v44 = vunpack.c.l.b16 %v26
  %v45 = vunpack.c.h.b16 %v26
  %v46 = vunpack.c.l.b16 %v27
  %v47 = vunpack.c.h.b16 %v27
  %v48 = vunpack.c.l.b16 %v28
  %v49 = vunpack.c.h.b16 %v28
  %v50 = vunpack.c.l.b16 %v29
  %v51 = vunpack.c.h.b16 %v29
  %v52 = vunpack.c.l.b16 %v30
  %v53 = vunpack.c.h.b16 %v30
  %v54 = vunpack.c.l.b16 %v31
  %v55 = vunpack.c.h.b16 %v31
  %v56 = vpack.c.b16 %v42, %v40
  %v57 = vpack.c.b16 %v43, %v41
  %v58 = vpack.c.b16 %v46, %v44
  %v59 = vpack.c.b16 %v47, %v45
  %v60 = vpack.c.b16 %v50, %v48
  %v61 = vpack.c.b16 %v51, %v49
  %v62 = vpack.c.b16 %v54, %v52
  %v63 = vpack.c.b16 %v55, %v53
  %vm72 = vcmask 523264
  %v74 = vsel %vm72, %v23, 0
  %76 = vmatprep.subr.bf16.mxu0 %v57
  %77 = vmatpush1.bf16.msra.mxu0 %v56
  %78 = vmatprep.subr.bf16.mxu0 %v59
  %79 = vmatpush1.bf16.msra.mxu0 %v58
  %80 = vmatprep.subr.bf16.mxu0 %v61
  %81 = vmatpush1.bf16.msra.mxu0 %v60
  %82 = vmatprep.subr.bf16.mxu0 %v63
  %83 = vmatpush1.bf16.msra.mxu0 %v62
  %84 = vmatprep.subr.bf16.mxu0 0
  %85 = vmatpush1.bf16.msra.mxu0 0
  %86 = vmatprep.subr.bf16.mxu0 0
  %87 = vmatpush1.bf16.msra.mxu0 0
  %88 = vmatprep.subr.bf16.mxu0 0
  %89 = vmatpush1.bf16.msra.mxu0 0
  %90 = vmatprep.subr.bf16.mxu0 0
  %91 = vmatpush1.bf16.msra.mxu0 0
  %92 = vmatprep.subr.bf16.mxu0 0
  %93 = vmatpush1.bf16.msra.mxu0 0
  %94 = vmatprep.subr.bf16.mxu0 0
  %95 = vmatpush1.bf16.msra.mxu0 0
  %96 = vmatprep.subr.bf16.mxu0 0
  %97 = vmatpush1.bf16.msra.mxu0 0
  %98 = vmatprep.subr.bf16.mxu0 0
  %99 = vmatpush1.bf16.msra.mxu0 0
  %100 = vmatprep.subr.bf16.mxu0 0
  %101 = vmatpush1.bf16.msra.mxu0 0
  %102 = vmatprep.subr.bf16.mxu0 0
  %103 = vmatpush1.bf16.msra.mxu0 0
  %104 = vmatprep.subr.bf16.mxu0 0
  %105 = vmatpush1.bf16.msra.mxu0 0
  %106 = vmatprep.subr.bf16.mxu0 0
  %107 = vmatpush1.bf16.msra.mxu0 0
  %108 = vmatprep.mubr.bf16.mxu0 0
  %109 = vmatmul.mubr.bf16.gmra.mrb[0].mxu0 %v74
  %v110 = vpop.f32.mrb[0].mxu0
  %v111 = vadd.f32 0.0, %v110
  %v112 = vpop.f32.mrb[0].mxu0
  %v113 = vadd.f32 0.0, %v112
  %v114 = vpop.f32.mrb[0].mxu0
  %v115 = vpop.f32.mrb[0].mxu0
  %116 = vdwg.mxu0
  %v117 = vadd.f32 %v21, %v111
  %v118 = vadd.f32 %v22, %v113
  %v119 = vxor.u32 %v117, 2147483648
  %v120 = vmul.f32 %v119, 1.442695
  %v121 = vpow.pop %v120
  %v122 = vadd.f32 %v121, 1.0
  %v123 = vrcp.pop %v122
  %v124 = vmul.f32 1.0, %v123
  %v125 = vtanh.pop %v118
  %v126 = vxor.u32 %v118, 2147483648
  %v127 = vmul.f32 %v126, 1.442695
  %v128 = vpow.pop %v127
  %v129 = vadd.f32 %v128, 1.0
  %v130 = vrcp.pop %v129
  %v131 = vmul.f32 1.0, %v130
  %133 = vrot.lane.b32.xlu0 %v20, 64
  %v134 = vpop.permute.xlu0 %133
  %v136 = vmul.f32 %v124, %v134
  %v137 = vmul.f32 %v124, %v125
  %139 = vrot.lane.b32.xlu0 %v137, 64
  %v140 = vpop.permute.xlu0 %139
  %v142 = vadd.f32 %v136, %v140
  %v143 = vtanh.pop %v142
  %v144 = vmul.f32 %v131, %v143
  %s145 = scalar_lea.vmem %s0, 16
  %v146 = vld [vmem:[%s145] sm:$0xff]
  %v147 = vld [vmem:[%s145 + $0x8] sm:$0xff]
  %v148 = vpack.c.bf16 %v144, %v144
  %150 = vrot.lane.b32.xlu0 %v148, 64
  %v151 = vpop.permute.xlu0 %150
  %v153 = vsel %vm72, %v151, 0
  %155 = vmatprep.subr.bf16.mxu0 %v57
  %156 = vmatpush1.bf16.msra.mxu0 %v56
  %157 = vmatprep.subr.bf16.mxu0 %v59
  %158 = vmatpush1.bf16.msra.mxu0 %v58
  %159 = vmatprep.subr.bf16.mxu0 %v61
  %160 = vmatpush1.bf16.msra.mxu0 %v60
  %161 = vmatprep.subr.bf16.mxu0 %v63
  %162 = vmatpush1.bf16.msra.mxu0 %v62
  %163 = vmatprep.subr.bf16.mxu0 0
  %164 = vmatpush1.bf16.msra.mxu0 0
  %165 = vmatprep.subr.bf16.mxu0 0
  %166 = vmatpush1.bf16.msra.mxu0 0
  %167 = vmatprep.subr.bf16.mxu0 0
  %168 = vmatpush1.bf16.msra.mxu0 0
  %169 = vmatprep.subr.bf16.mxu0 0
  %170 = vmatpush1.bf16.msra.mxu0 0
  %171 = vmatprep.subr.bf16.mxu0 0
  %172 = vmatpush1.bf16.msra.mxu0 0
  %173 = vmatprep.subr.bf16.mxu0 0
  %174 = vmatpush1.bf16.msra.mxu0 0
  %175 = vmatprep.subr.bf16.mxu0 0
  %176 = vmatpush1.bf16.msra.mxu0 0
  %177 = vmatprep.subr.bf16.mxu0 0
  %178 = vmatpush1.bf16.msra.mxu0 0
  %179 = vmatprep.subr.bf16.mxu0 0
  %180 = vmatpush1.bf16.msra.mxu0 0
  %181 = vmatprep.subr.bf16.mxu0 0
  %182 = vmatpush1.bf16.msra.mxu0 0
  %183 = vmatprep.subr.bf16.mxu0 0
  %184 = vmatpush1.bf16.msra.mxu0 0
  %185 = vmatprep.subr.bf16.mxu0 0
  %186 = vmatpush1.bf16.msra.mxu0 0
  %187 = vmatprep.mubr.bf16.mxu0 0
  %188 = vmatmul.mubr.bf16.gmra.mrb[0].mxu0 %v153
  %v189 = vpop.f32.mrb[0].mxu0
  %v190 = vadd.f32 0.0, %v189
  %v191 = vpop.f32.mrb[0].mxu0
  %v192 = vadd.f32 0.0, %v191
  %v193 = vpop.f32.mrb[0].mxu0
  %v194 = vpop.f32.mrb[0].mxu0
  %195 = vdwg.mxu0
  %v196 = vadd.f32 %v146, %v190
  %v197 = vadd.f32 %v147, %v192
  %v198 = vxor.u32 %v196, 2147483648
  %v199 = vmul.f32 %v198, 1.442695
  %v200 = vpow.pop %v199
  %v201 = vadd.f32 %v200, 1.0
  %v202 = vrcp.pop %v201
  %v203 = vmul.f32 1.0, %v202
  %v204 = vtanh.pop %v197
  %v205 = vxor.u32 %v197, 2147483648
  %v206 = vmul.f32 %v205, 1.442695
  %v207 = vpow.pop %v206
  %v208 = vadd.f32 %v207, 1.0
  %v209 = vrcp.pop %v208
  %v210 = vmul.f32 1.0, %v209
  %v211 = vmul.f32 %v203, %v142
  %v212 = vmul.f32 %v203, %v204
  %214 = vrot.lane.b32.xlu0 %v212, 64
  %v215 = vpop.permute.xlu0 %214
  %v217 = vadd.f32 %v211, %v215
  %v218 = vtanh.pop %v217
  %v219 = vmul.f32 %v210, %v218
  %s220 = scalar_lea.vmem %s0, 32
  %v221 = vld [vmem:[%s220] sm:$0xff]
  %v222 = vld [vmem:[%s220 + $0x8] sm:$0xff]
  %v223 = vpack.c.bf16 %v219, %v219
  %225 = vrot.lane.b32.xlu0 %v223, 64
  %v226 = vpop.permute.xlu0 %225
  %v228 = vsel %vm72, %v226, 0
  %230 = vmatprep.subr.bf16.mxu0 %v57
  %231 = vmatpush1.bf16.msra.mxu0 %v56
  %232 = vmatprep.subr.bf16.mxu0 %v59
  %233 = vmatpush1.bf16.msra.mxu0 %v58
  %234 = vmatprep.subr.bf16.mxu0 %v61
  %235 = vmatpush1.bf16.msra.mxu0 %v60
  %236 = vmatprep.subr.bf16.mxu0 %v63
  %237 = vmatpush1.bf16.msra.mxu0 %v62
  %238 = vmatprep.subr.bf16.mxu0 0
  %239 = vmatpush1.bf16.msra.mxu0 0
  %240 = vmatprep.subr.bf16.mxu0 0
  %241 = vmatpush1.bf16.msra.mxu0 0
  %242 = vmatprep.subr.bf16.mxu0 0
  %243 = vmatpush1.bf16.msra.mxu0 0
  %244 = vmatprep.subr.bf16.mxu0 0
  %245 = vmatpush1.bf16.msra.mxu0 0
  %246 = vmatprep.subr.bf16.mxu0 0
  %247 = vmatpush1.bf16.msra.mxu0 0
  %248 = vmatprep.subr.bf16.mxu0 0
  %249 = vmatpush1.bf16.msra.mxu0 0
  %250 = vmatprep.subr.bf16.mxu0 0
  %251 = vmatpush1.bf16.msra.mxu0 0
  %252 = vmatprep.subr.bf16.mxu0 0
  %253 = vmatpush1.bf16.msra.mxu0 0
  %254 = vmatprep.subr.bf16.mxu0 0
  %255 = vmatpush1.bf16.msra.mxu0 0
  %256 = vmatprep.subr.bf16.mxu0 0
  %257 = vmatpush1.bf16.msra.mxu0 0
  %258 = vmatprep.subr.bf16.mxu0 0
  %259 = vmatpush1.bf16.msra.mxu0 0
  %260 = vmatprep.subr.bf16.mxu0 0
  %261 = vmatpush1.bf16.msra.mxu0 0
  %262 = vmatprep.mubr.bf16.mxu0 0
  %263 = vmatmul.mubr.bf16.gmra.mrb[0].mxu0 %v228
  %v264 = vpop.f32.mrb[0].mxu0
  %v265 = vadd.f32 0.0, %v264
  %v266 = vpop.f32.mrb[0].mxu0
  %v267 = vadd.f32 0.0, %v266
  %v268 = vpop.f32.mrb[0].mxu0
  %v269 = vpop.f32.mrb[0].mxu0
  %270 = vdwg.mxu0
  %v271 = vadd.f32 %v221, %v265
  %v272 = vadd.f32 %v222, %v267
  %v273 = vxor.u32 %v271, 2147483648
  %v274 = vmul.f32 %v273, 1.442695
  %v275 = vpow.pop %v274
  %v276 = vadd.f32 %v275, 1.0
  %v277 = vrcp.pop %v276
  %v278 = vmul.f32 1.0, %v277
  %v279 = vtanh.pop %v272
  %v280 = vxor.u32 %v272, 2147483648
  %v281 = vmul.f32 %v280, 1.442695
  %v282 = vpow.pop %v281
  %v283 = vadd.f32 %v282, 1.0
  %v284 = vrcp.pop %v283
  %v285 = vmul.f32 1.0, %v284
  %v286 = vmul.f32 %v278, %v217
  %v287 = vmul.f32 %v278, %v279
  %289 = vrot.lane.b32.xlu0 %v287, 64
  %v290 = vpop.permute.xlu0 %289
  %v292 = vadd.f32 %v286, %v290
  %v293 = vtanh.pop %v292
  %v294 = vmul.f32 %v285, %v293
  %s295 = scalar_lea.vmem %s0, 48
  %v296 = vld [vmem:[%s295] sm:$0xff]
  %v297 = vld [vmem:[%s295 + $0x8] sm:$0xff]
  %v298 = vpack.c.bf16 %v294, %v294
  %300 = vrot.lane.b32.xlu0 %v298, 64
  %v301 = vpop.permute.xlu0 %300
  %v303 = vsel %vm72, %v301, 0
  %305 = vmatprep.subr.bf16.mxu0 %v57
  %306 = vmatpush1.bf16.msra.mxu0 %v56
  %307 = vmatprep.subr.bf16.mxu0 %v59
  %308 = vmatpush1.bf16.msra.mxu0 %v58
  %309 = vmatprep.subr.bf16.mxu0 %v61
  %310 = vmatpush1.bf16.msra.mxu0 %v60
  %311 = vmatprep.subr.bf16.mxu0 %v63
  %312 = vmatpush1.bf16.msra.mxu0 %v62
  %313 = vmatprep.subr.bf16.mxu0 0
  %314 = vmatpush1.bf16.msra.mxu0 0
  %315 = vmatprep.subr.bf16.mxu0 0
  %316 = vmatpush1.bf16.msra.mxu0 0
  %317 = vmatprep.subr.bf16.mxu0 0
  %318 = vmatpush1.bf16.msra.mxu0 0
  %319 = vmatprep.subr.bf16.mxu0 0
  %320 = vmatpush1.bf16.msra.mxu0 0
  %321 = vmatprep.subr.bf16.mxu0 0
  %322 = vmatpush1.bf16.msra.mxu0 0
  %323 = vmatprep.subr.bf16.mxu0 0
  %324 = vmatpush1.bf16.msra.mxu0 0
  %325 = vmatprep.subr.bf16.mxu0 0
  %326 = vmatpush1.bf16.msra.mxu0 0
  %327 = vmatprep.subr.bf16.mxu0 0
  %328 = vmatpush1.bf16.msra.mxu0 0
  %329 = vmatprep.subr.bf16.mxu0 0
  %330 = vmatpush1.bf16.msra.mxu0 0
  %331 = vmatprep.subr.bf16.mxu0 0
  %332 = vmatpush1.bf16.msra.mxu0 0
  %333 = vmatprep.subr.bf16.mxu0 0
  %334 = vmatpush1.bf16.msra.mxu0 0
  %335 = vmatprep.subr.bf16.mxu0 0
  %336 = vmatpush1.bf16.msra.mxu0 0
  %337 = vmatprep.mubr.bf16.mxu0 0
  %338 = vmatmul.mubr.bf16.gmra.mrb[0].mxu0 %v303
  %v339 = vpop.f32.mrb[0].mxu0
  %v340 = vadd.f32 0.0, %v339
  %v341 = vpop.f32.mrb[0].mxu0
  %v342 = vadd.f32 0.0, %v341
  %v343 = vpop.f32.mrb[0].mxu0
  %v344 = vpop.f32.mrb[0].mxu0
  %345 = vdwg.mxu0
  %v346 = vadd.f32 %v296, %v340
  %v347 = vadd.f32 %v297, %v342
  %v348 = vxor.u32 %v346, 2147483648
  %v349 = vmul.f32 %v348, 1.442695
  %v350 = vpow.pop %v349
  %v351 = vadd.f32 %v350, 1.0
  %v352 = vrcp.pop %v351
  %v353 = vmul.f32 1.0, %v352
  %v354 = vtanh.pop %v347
  %v355 = vxor.u32 %v347, 2147483648
  %v356 = vmul.f32 %v355, 1.442695
  %v357 = vpow.pop %v356
  %v358 = vadd.f32 %v357, 1.0
  %v359 = vrcp.pop %v358
  %v360 = vmul.f32 1.0, %v359
  %v361 = vmul.f32 %v353, %v292
  %v362 = vmul.f32 %v353, %v354
  %364 = vrot.lane.b32.xlu0 %v362, 64
  %v365 = vpop.permute.xlu0 %364
  %v367 = vadd.f32 %v361, %v365
  %v368 = vtanh.pop %v367
  %v369 = vmul.f32 %v360, %v368
  %s370 = scalar_lea.vmem %s0, 64
  %v371 = vld [vmem:[%s370] sm:$0xff]
  %v372 = vld [vmem:[%s370 + $0x8] sm:$0xff]
  %v373 = vpack.c.bf16 %v369, %v369
  %375 = vrot.lane.b32.xlu0 %v373, 64
  %v376 = vpop.permute.xlu0 %375
  %v378 = vsel %vm72, %v376, 0
  %380 = vmatprep.subr.bf16.mxu0 %v57
  %381 = vmatpush1.bf16.msra.mxu0 %v56
  %382 = vmatprep.subr.bf16.mxu0 %v59
  %383 = vmatpush1.bf16.msra.mxu0 %v58
  %384 = vmatprep.subr.bf16.mxu0 %v61
  %385 = vmatpush1.bf16.msra.mxu0 %v60
  %386 = vmatprep.subr.bf16.mxu0 %v63
  %387 = vmatpush1.bf16.msra.mxu0 %v62
  %388 = vmatprep.subr.bf16.mxu0 0
  %389 = vmatpush1.bf16.msra.mxu0 0
  %390 = vmatprep.subr.bf16.mxu0 0
  %391 = vmatpush1.bf16.msra.mxu0 0
  %392 = vmatprep.subr.bf16.mxu0 0
  %393 = vmatpush1.bf16.msra.mxu0 0
  %394 = vmatprep.subr.bf16.mxu0 0
  %395 = vmatpush1.bf16.msra.mxu0 0
  %396 = vmatprep.subr.bf16.mxu0 0
  %397 = vmatpush1.bf16.msra.mxu0 0
  %398 = vmatprep.subr.bf16.mxu0 0
  %399 = vmatpush1.bf16.msra.mxu0 0
  %400 = vmatprep.subr.bf16.mxu0 0
  %401 = vmatpush1.bf16.msra.mxu0 0
  %402 = vmatprep.subr.bf16.mxu0 0
  %403 = vmatpush1.bf16.msra.mxu0 0
  %404 = vmatprep.subr.bf16.mxu0 0
  %405 = vmatpush1.bf16.msra.mxu0 0
  %406 = vmatprep.subr.bf16.mxu0 0
  %407 = vmatpush1.bf16.msra.mxu0 0
  %408 = vmatprep.subr.bf16.mxu0 0
  %409 = vmatpush1.bf16.msra.mxu0 0
  %410 = vmatprep.subr.bf16.mxu0 0
  %411 = vmatpush1.bf16.msra.mxu0 0
  %412 = vmatprep.mubr.bf16.mxu0 0
  %413 = vmatmul.mubr.bf16.gmra.mrb[0].mxu0 %v378
  %v414 = vpop.f32.mrb[0].mxu0
  %v415 = vadd.f32 0.0, %v414
  %v416 = vpop.f32.mrb[0].mxu0
  %v417 = vadd.f32 0.0, %v416
  %v418 = vpop.f32.mrb[0].mxu0
  %v419 = vpop.f32.mrb[0].mxu0
  %420 = vdwg.mxu0
  %v421 = vadd.f32 %v371, %v415
  %v422 = vadd.f32 %v372, %v417
  %v423 = vxor.u32 %v421, 2147483648
  %v424 = vmul.f32 %v423, 1.442695
  %v425 = vpow.pop %v424
  %v426 = vadd.f32 %v425, 1.0
  %v427 = vrcp.pop %v426
  %v428 = vmul.f32 1.0, %v427
  %v429 = vtanh.pop %v422
  %v430 = vxor.u32 %v422, 2147483648
  %v431 = vmul.f32 %v430, 1.442695
  %v432 = vpow.pop %v431
  %v433 = vadd.f32 %v432, 1.0
  %v434 = vrcp.pop %v433
  %v435 = vmul.f32 1.0, %v434
  %v436 = vmul.f32 %v428, %v367
  %v437 = vmul.f32 %v428, %v429
  %439 = vrot.lane.b32.xlu0 %v437, 64
  %v440 = vpop.permute.xlu0 %439
  %v442 = vadd.f32 %v436, %v440
  %v443 = vtanh.pop %v442
  %v444 = vmul.f32 %v435, %v443
  %s445 = scalar_lea.vmem %s0, 80
  %v446 = vld [vmem:[%s445] sm:$0xff]
  %v447 = vld [vmem:[%s445 + $0x8] sm:$0xff]
  %v448 = vpack.c.bf16 %v444, %v444
  %450 = vrot.lane.b32.xlu0 %v448, 64
  %v451 = vpop.permute.xlu0 %450
  %v453 = vsel %vm72, %v451, 0
  %455 = vmatprep.subr.bf16.mxu0 %v57
  %456 = vmatpush1.bf16.msra.mxu0 %v56
  %457 = vmatprep.subr.bf16.mxu0 %v59
  %458 = vmatpush1.bf16.msra.mxu0 %v58
  %459 = vmatprep.subr.bf16.mxu0 %v61
  %460 = vmatpush1.bf16.msra.mxu0 %v60
  %461 = vmatprep.subr.bf16.mxu0 %v63
  %462 = vmatpush1.bf16.msra.mxu0 %v62
  %463 = vmatprep.subr.bf16.mxu0 0
  %464 = vmatpush1.bf16.msra.mxu0 0
  %465 = vmatprep.subr.bf16.mxu0 0
  %466 = vmatpush1.bf16.msra.mxu0 0
  %467 = vmatprep.subr.bf16.mxu0 0
  %468 = vmatpush1.bf16.msra.mxu0 0
  %469 = vmatprep.subr.bf16.mxu0 0
  %470 = vmatpush1.bf16.msra.mxu0 0
  %471 = vmatprep.subr.bf16.mxu0 0
  %472 = vmatpush1.bf16.msra.mxu0 0
  %473 = vmatprep.subr.bf16.mxu0 0
  %474 = vmatpush1.bf16.msra.mxu0 0
  %475 = vmatprep.subr.bf16.mxu0 0
  %476 = vmatpush1.bf16.msra.mxu0 0
  %477 = vmatprep.subr.bf16.mxu0 0
  %478 = vmatpush1.bf16.msra.mxu0 0
  %479 = vmatprep.subr.bf16.mxu0 0
  %480 = vmatpush1.bf16.msra.mxu0 0
  %481 = vmatprep.subr.bf16.mxu0 0
  %482 = vmatpush1.bf16.msra.mxu0 0
  %483 = vmatprep.subr.bf16.mxu0 0
  %484 = vmatpush1.bf16.msra.mxu0 0
  %485 = vmatprep.subr.bf16.mxu0 0
  %486 = vmatpush1.bf16.msra.mxu0 0
  %487 = vmatprep.mubr.bf16.mxu0 0
  %488 = vmatmul.mubr.bf16.gmra.mrb[0].mxu0 %v453
  %v489 = vpop.f32.mrb[0].mxu0
  %v490 = vadd.f32 0.0, %v489
  %v491 = vpop.f32.mrb[0].mxu0
  %v492 = vadd.f32 0.0, %v491
  %v493 = vpop.f32.mrb[0].mxu0
  %v494 = vpop.f32.mrb[0].mxu0
  %495 = vdwg.mxu0
  %v496 = vadd.f32 %v446, %v490
  %v497 = vadd.f32 %v447, %v492
  %v498 = vxor.u32 %v496, 2147483648
  %v499 = vmul.f32 %v498, 1.442695
  %v500 = vpow.pop %v499
  %v501 = vadd.f32 %v500, 1.0
  %v502 = vrcp.pop %v501
  %v503 = vmul.f32 1.0, %v502
  %v504 = vtanh.pop %v497
  %v505 = vxor.u32 %v497, 2147483648
  %v506 = vmul.f32 %v505, 1.442695
  %v507 = vpow.pop %v506
  %v508 = vadd.f32 %v507, 1.0
  %v509 = vrcp.pop %v508
  %v510 = vmul.f32 1.0, %v509
  %v511 = vmul.f32 %v503, %v442
  %v512 = vmul.f32 %v503, %v504
  %514 = vrot.lane.b32.xlu0 %v512, 64
  %v515 = vpop.permute.xlu0 %514
  %v517 = vadd.f32 %v511, %v515
  %v518 = vtanh.pop %v517
  %v519 = vmul.f32 %v510, %v518
  %s520 = scalar_lea.vmem %s0, 96
  %v521 = vld [vmem:[%s520] sm:$0xff]
  %v522 = vld [vmem:[%s520 + $0x8] sm:$0xff]
  %v523 = vpack.c.bf16 %v519, %v519
  %525 = vrot.lane.b32.xlu0 %v523, 64
  %v526 = vpop.permute.xlu0 %525
  %v528 = vsel %vm72, %v526, 0
  %530 = vmatprep.subr.bf16.mxu0 %v57
  %531 = vmatpush1.bf16.msra.mxu0 %v56
  %532 = vmatprep.subr.bf16.mxu0 %v59
  %533 = vmatpush1.bf16.msra.mxu0 %v58
  %534 = vmatprep.subr.bf16.mxu0 %v61
  %535 = vmatpush1.bf16.msra.mxu0 %v60
  %536 = vmatprep.subr.bf16.mxu0 %v63
  %537 = vmatpush1.bf16.msra.mxu0 %v62
  %538 = vmatprep.subr.bf16.mxu0 0
  %539 = vmatpush1.bf16.msra.mxu0 0
  %540 = vmatprep.subr.bf16.mxu0 0
  %541 = vmatpush1.bf16.msra.mxu0 0
  %542 = vmatprep.subr.bf16.mxu0 0
  %543 = vmatpush1.bf16.msra.mxu0 0
  %544 = vmatprep.subr.bf16.mxu0 0
  %545 = vmatpush1.bf16.msra.mxu0 0
  %546 = vmatprep.subr.bf16.mxu0 0
  %547 = vmatpush1.bf16.msra.mxu0 0
  %548 = vmatprep.subr.bf16.mxu0 0
  %549 = vmatpush1.bf16.msra.mxu0 0
  %550 = vmatprep.subr.bf16.mxu0 0
  %551 = vmatpush1.bf16.msra.mxu0 0
  %552 = vmatprep.subr.bf16.mxu0 0
  %553 = vmatpush1.bf16.msra.mxu0 0
  %554 = vmatprep.subr.bf16.mxu0 0
  %555 = vmatpush1.bf16.msra.mxu0 0
  %556 = vmatprep.subr.bf16.mxu0 0
  %557 = vmatpush1.bf16.msra.mxu0 0
  %558 = vmatprep.subr.bf16.mxu0 0
  %559 = vmatpush1.bf16.msra.mxu0 0
  %560 = vmatprep.subr.bf16.mxu0 0
  %561 = vmatpush1.bf16.msra.mxu0 0
  %562 = vmatprep.mubr.bf16.mxu0 0
  %563 = vmatmul.mubr.bf16.gmra.mrb[0].mxu0 %v528
  %v564 = vpop.f32.mrb[0].mxu0
  %v565 = vadd.f32 0.0, %v564
  %v566 = vpop.f32.mrb[0].mxu0
  %v567 = vadd.f32 0.0, %v566
  %v568 = vpop.f32.mrb[0].mxu0
  %v569 = vpop.f32.mrb[0].mxu0
  %570 = vdwg.mxu0
  %v571 = vadd.f32 %v521, %v565
  %v572 = vadd.f32 %v522, %v567
  %v573 = vxor.u32 %v571, 2147483648
  %v574 = vmul.f32 %v573, 1.442695
  %v575 = vpow.pop %v574
  %v576 = vadd.f32 %v575, 1.0
  %v577 = vrcp.pop %v576
  %v578 = vmul.f32 1.0, %v577
  %v579 = vtanh.pop %v572
  %v580 = vxor.u32 %v572, 2147483648
  %v581 = vmul.f32 %v580, 1.442695
  %v582 = vpow.pop %v581
  %v583 = vadd.f32 %v582, 1.0
  %v584 = vrcp.pop %v583
  %v585 = vmul.f32 1.0, %v584
  %v586 = vmul.f32 %v578, %v517
  %v587 = vmul.f32 %v578, %v579
  %589 = vrot.lane.b32.xlu0 %v587, 64
  %v590 = vpop.permute.xlu0 %589
  %v592 = vadd.f32 %v586, %v590
  %v593 = vtanh.pop %v592
  %v594 = vmul.f32 %v585, %v593
  %s595 = scalar_lea.vmem %s0, 112
  %v596 = vld [vmem:[%s595] sm:$0xff]
  %v597 = vld [vmem:[%s595 + $0x8] sm:$0xff]
  %v598 = vpack.c.bf16 %v594, %v594
  %600 = vrot.lane.b32.xlu0 %v598, 64
  %v601 = vpop.permute.xlu0 %600
  %v603 = vsel %vm72, %v601, 0
  %605 = vmatprep.subr.bf16.mxu0 %v57
  %606 = vmatpush1.bf16.msra.mxu0 %v56
  %607 = vmatprep.subr.bf16.mxu0 %v59
  %608 = vmatpush1.bf16.msra.mxu0 %v58
  %609 = vmatprep.subr.bf16.mxu0 %v61
  %610 = vmatpush1.bf16.msra.mxu0 %v60
  %611 = vmatprep.subr.bf16.mxu0 %v63
  %612 = vmatpush1.bf16.msra.mxu0 %v62
  %613 = vmatprep.subr.bf16.mxu0 0
  %614 = vmatpush1.bf16.msra.mxu0 0
  %615 = vmatprep.subr.bf16.mxu0 0
  %616 = vmatpush1.bf16.msra.mxu0 0
  %617 = vmatprep.subr.bf16.mxu0 0
  %618 = vmatpush1.bf16.msra.mxu0 0
  %619 = vmatprep.subr.bf16.mxu0 0
  %620 = vmatpush1.bf16.msra.mxu0 0
  %621 = vmatprep.subr.bf16.mxu0 0
  %622 = vmatpush1.bf16.msra.mxu0 0
  %623 = vmatprep.subr.bf16.mxu0 0
  %624 = vmatpush1.bf16.msra.mxu0 0
  %625 = vmatprep.subr.bf16.mxu0 0
  %626 = vmatpush1.bf16.msra.mxu0 0
  %627 = vmatprep.subr.bf16.mxu0 0
  %628 = vmatpush1.bf16.msra.mxu0 0
  %629 = vmatprep.subr.bf16.mxu0 0
  %630 = vmatpush1.bf16.msra.mxu0 0
  %631 = vmatprep.subr.bf16.mxu0 0
  %632 = vmatpush1.bf16.msra.mxu0 0
  %633 = vmatprep.subr.bf16.mxu0 0
  %634 = vmatpush1.bf16.msra.mxu0 0
  %635 = vmatprep.subr.bf16.mxu0 0
  %636 = vmatpush1.bf16.msra.mxu0 0
  %637 = vmatprep.mubr.bf16.mxu0 0
  %638 = vmatmul.mubr.bf16.gmra.mrb[0].mxu0 %v603
  %v639 = vpop.f32.mrb[0].mxu0
  %v640 = vadd.f32 0.0, %v639
  %v641 = vpop.f32.mrb[0].mxu0
  %v642 = vadd.f32 0.0, %v641
  %v643 = vpop.f32.mrb[0].mxu0
  %v644 = vpop.f32.mrb[0].mxu0
  %645 = vdwg.mxu0
  %v646 = vadd.f32 %v596, %v640
  %v647 = vadd.f32 %v597, %v642
  %v648 = vxor.u32 %v646, 2147483648
  %v649 = vmul.f32 %v648, 1.442695
  %v650 = vpow.pop %v649
  %v651 = vadd.f32 %v650, 1.0
  %v652 = vrcp.pop %v651
  %v653 = vmul.f32 1.0, %v652
  %v654 = vtanh.pop %v647
  %v655 = vxor.u32 %v647, 2147483648
  %v656 = vmul.f32 %v655, 1.442695
  %v657 = vpow.pop %v656
  %v658 = vadd.f32 %v657, 1.0
  %v659 = vrcp.pop %v658
  %v660 = vmul.f32 1.0, %v659
  %v661 = vmul.f32 %v653, %v592
  %v662 = vmul.f32 %v653, %v654
  %664 = vrot.lane.b32.xlu0 %v662, 64
  %v665 = vpop.permute.xlu0 %664
  %v667 = vadd.f32 %v661, %v665
  %v668 = vtanh.pop %v667
  %v669 = vmul.f32 %v660, %v668
  %671 = vrot.lane.b32.xlu0 %v669, 64
  %v672 = vpop.permute.xlu0 %671
  %674 = vst.msk [vmem:[#allocation2] sm:$0xff] %vm72, %v672
  %676 = vrot.lane.b32.xlu0 %v667, 64
  %v677 = vpop.permute.xlu0 %676
  %679 = vst.msk [vmem:[#allocation3] sm:$0xff] %vm72, %v677
  // Predicated region
  $region14: #{code_encoder_forward.1} parent=0 // pred_check
    %p680 = pneg %p12
  $region15: #{code_encoder_forward.1} parent=0 // pred_check_branch
    %682 = sbr.rel (%p680) target = $region17
  $region16: #{code_encoder_forward.1} parent=0 // pred_region
    %683 = vst.msk [vmem:[%s2] sm:$0xff] %vm72, %v672
  $region17: #{code_encoder_forward.1} parent=0 // pred_fallthru
    _
  // Predicated region
  $region18: #{code_encoder_forward.1} parent=0 // pred_check
    _
  $region19: #{code_encoder_forward.1} parent=0 // pred_check_branch
    %685 = sbr.rel (0) target = $region21
  $region20: #{code_encoder_forward.1} parent=0 // pred_region
    _
  $region21: #{code_encoder_forward.1} parent=0 // pred_fallthru
    _
  // Predicated region
  $region22: #{code_encoder_forward.1} parent=0 // pred_check
    _
  $region23: #{code_encoder_forward.1} parent=0 // pred_check_branch
    %687 = sbr.rel (0) target = $region25
  $region24: #{code_encoder_forward.1} parent=0 // pred_region
    _
  $region25: #{code_encoder_forward.1} parent=0 // pred_fallthru
    _

</llo_original>
